<compile_context>
chip_gen: v7x
topology: tpu7x:2x2x1
jax: 0.10.0
libtpu: 0.0.40
codegen_flags: <defaults>
</compile_context>

<pallas_src>
import jax
import jax.numpy as jnp
from jax.experimental import pallas as pl
from jax.experimental.pallas import tpu as pltpu

_LANE = 128           # lane (last-dim) tile
_SUBLANE_BF16 = 16    # bf16 sublane pack: one bf16 vreg tile is (16, 128)


def _round_up(n, m):
    return (n + m - 1) // m * m


def _device_kind():
    try:
        return jax.devices()[0].device_kind.lower()
    except Exception:
        return ""


def _vmem_limit_bytes(kind):
    if "v7" in kind:
        return 48 << 20       # 64 MiB physical per TensorCore -> leave headroom
    if any(v in kind for v in ("v4", "v5", "v6")):
        return 100 << 20      # 128 MiB physical VMEM parts
    return None               # unknown part: keep the compiler default


def _make_fcnet_kernel(num_layers, hidden_act_dtype):
    """All Linear+Sigmoid layers fused on one batch tile."""

    def _sigmoid(z):
        # Single EUP push (tanh) instead of a possible exp + divide lowering.
        return 0.5 * jnp.tanh(0.5 * z) + 0.5

    def kernel(*refs):
        # refs = (x_ref, w0, b0, w1, b1, ..., w_{L-1}, b_{L-1}, out_ref)
        x_ref = refs[0]
        out_ref = refs[-1]
        # f32 input tile -> bf16 MXU operand; casting in-kernel avoids an extra
        # pre-kernel pad/convert HBM pass.
        h = x_ref[...].astype(jnp.bfloat16)
        for i in range(num_layers):
            w = refs[1 + 2 * i][...]          # bf16 (in_i, out_pad_i)
            b = refs[2 + 2 * i][...]          # f32  (1, out_pad_i)
            a = jnp.dot(h, w, preferred_element_type=jnp.float32) + b
            if i + 1 < num_layers:
                # Hidden activation: bf16 on v6e/v7x (halves EUP work), f32 on v5e.
                h = _sigmoid(a.astype(hidden_act_dtype)).astype(jnp.bfloat16)
            else:
                # Final sigmoid stays in f32 (feeds the f32 output directly).
                out_ref[...] = _sigmoid(a).astype(out_ref.dtype)

    return kernel


def _pad_params(params):
    """Pad feature dims to 128 lanes; cast W to bf16.

    Layer 0 keeps its raw fan_in (block == full array dim is legal, and x is
    cast in-kernel); deeper layers pad fan_in to the previous layer's padded
    output width with ZERO rows, so the sigmoid(0)=0.5 of padded activation
    columns never leaks into real outputs.
    """
    padded = []
    for li, (w, b) in enumerate(params):
        fan_in, fan_out = w.shape
        in_pad = fan_in if li == 0 else _round_up(fan_in, _LANE)
        out_pad = _round_up(fan_out, _LANE)
        w_p = jnp.zeros((in_pad, out_pad), jnp.bfloat16)
        w_p = w_p.at[:fan_in, :fan_out].set(w.astype(jnp.bfloat16))
        b_p = jnp.zeros((1, out_pad), jnp.float32)
        b_p = b_p.at[:, :fan_out].set(b.astype(jnp.float32))
        padded.append((w_p, b_p))
    return padded


def _pick_batch_tile(batch, batch_tile):
    """Batch tile: multiple of 16, bounded padding waste, >=2 grid steps if possible."""
    batch16 = _round_up(batch, _SUBLANE_BF16)
    tb = min(_round_up(batch_tile, _SUBLANE_BF16), batch16)
    # Bound padding waste (~<12.5% of rows thrown away).
    while tb > _SUBLANE_BF16 and (_round_up(batch, tb) - batch16) * 8 > batch16:
        tb -= _SUBLANE_BF16
    # v7x megacore: prefer >=2 grid steps so the "parallel" batch axis actually
    # shards across both TensorCores (neutral on 1-TC v5e/v6e).
    if _round_up(batch, tb) // tb < 2 and batch16 >= 2 * _SUBLANE_BF16:
        tb = _round_up((batch16 + 1) // 2, _SUBLANE_BF16)
    return tb


def fcnet_forward(x, params, *, batch_tile=None):
    """x: (batch, indim) f32; params: list of (W[in,out], b[1,out]) f32 per layer."""
    num_layers = len(params)
    batch, indim = x.shape
    outdim = params[-1][0].shape[1]

    kind = _device_kind()
    if batch_tile is None:
        batch_tile = 256 if "v7" in kind else 512   # bigger tiles on 128 MiB parts
    # bf16 EUP/VPU exists on v6e/v7x; keep hidden sigmoid in f32 elsewhere (v5e).
    hidden_act_dtype = jnp.bfloat16 if ("v6" in kind or "v7" in kind) else jnp.float32

    padded_params = _pad_params(params)
    out_pad = padded_params[-1][0].shape[1]

    tb = _pick_batch_tile(batch, batch_tile)
    batch_pad = _round_up(batch, tb)

    # Only batch-pad x (still f32); the bf16 cast happens inside the kernel.
    if batch_pad == batch:
        x_p = x.astype(jnp.float32)
    else:
        x_p = jnp.zeros((batch_pad, indim), jnp.float32).at[:batch].set(x)

    flat_inputs = [x_p]
    for w, b in padded_params:
        flat_inputs += [w, b]

    # Advisory cost estimate for the XLA scheduler.
    flops = 2 * batch_pad * sum(int(w.shape[0]) * int(w.shape[1])
                                for w, _ in padded_params)
    transcendentals = batch_pad * sum(int(w.shape[1]) for w, _ in padded_params)
    bytes_accessed = (
        x_p.size * x_p.dtype.itemsize
        + sum(w.size * w.dtype.itemsize + b.size * b.dtype.itemsize
              for w, b in padded_params)
        + batch_pad * out_pad * 4)

    kernel = _make_fcnet_kernel(num_layers, hidden_act_dtype)

    def _call(single_buffer_resident):
        # Activation tile follows the batch program id; weights/biases use a
        # constant index_map so they stay VMEM-resident across grid steps.
        resident_kwargs = (
            dict(pipeline_mode=pl.Buffered(buffer_count=1))
            if single_buffer_resident else {})
        in_specs = [pl.BlockSpec((tb, indim), lambda i: (i, 0))]
        for w, b in padded_params:
            in_specs.append(pl.BlockSpec(w.shape, lambda i: (0, 0), **resident_kwargs))
            in_specs.append(pl.BlockSpec(b.shape, lambda i: (0, 0), **resident_kwargs))
        out_spec = pl.BlockSpec((tb, out_pad), lambda i: (i, 0))

        out = pl.pallas_call(
            kernel,
            out_shape=jax.ShapeDtypeStruct((batch_pad, out_pad), jnp.float32),
            grid_spec=pltpu.PrefetchScalarGridSpec(
                num_scalar_prefetch=0,
                grid=(batch_pad // tb,),
                in_specs=in_specs,
                out_specs=out_spec,
            ),
            compiler_params=pltpu.CompilerParams(
                dimension_semantics=("parallel",),
                vmem_limit_bytes=_vmem_limit_bytes(kind),
            ),
            cost_estimate=pl.CostEstimate(
                flops=flops,
                transcendentals=transcendentals,
                bytes_accessed=bytes_accessed,
            ),
        )(*flat_inputs)
        return jax.block_until_ready(out)

    try:
        # Single-buffer the grid-invariant weights/biases (halves their VMEM
        # footprint — decisive under v7x's 64 MiB VMEM).
        out_padded = _call(True)
    except Exception:
        # Fallback if this jax build rejects Buffered(buffer_count=1).
        out_padded = _call(False)

    return out_padded[:batch, :outdim]


def init_fcnet_params(key, indim, outdim, nlayers, width):
    """Deterministic init mimicking nn.Linear's U(-1/sqrt(fan_in), 1/sqrt(fan_in)).

    Layer structure matches FCNet.__init__:
      Linear(indim, width), nlayers x Linear(width, width), Linear(width, outdim),
    each followed by Sigmoid (applied in the kernel).
    """
    dims = [indim] + [width] * (nlayers + 1) + [outdim]
    params = []
    for i in range(len(dims) - 1):
        fan_in, fan_out = dims[i], dims[i + 1]
        key, kw, kb = jax.random.split(key, 3)
        bound = 1.0 / jnp.sqrt(jnp.float32(fan_in))
        # store W already transposed: (in, out)
        w = jax.random.uniform(kw, (fan_in, fan_out), jnp.float32, -bound, bound)
        b = jax.random.uniform(kb, (1, fan_out), jnp.float32, -bound, bound)
        params.append((w, b))
    return params


def fcnet_reference(x, params):
    """Pure-JAX f32 reference for correctness check."""
    h = x
    for w, b in params:
        h = jax.nn.sigmoid(h @ w + b)
    return h


if __name__ == "__main__":
    # Small shapes consistent with the module's forward: x is (batch, indim).
    batch, indim, outdim, nlayers, width = 8, 4, 3, 2, 32

    key = jax.random.PRNGKey(0)
    key, kx = jax.random.split(key)
    x = jax.random.normal(kx, (batch, indim), jnp.float32)

    params = init_fcnet_params(key, indim, outdim, nlayers, width)

    out = fcnet_forward(x, params)
    out = jax.block_until_ready(out)

    ref = fcnet_reference(x, params)
    assert out.shape == (batch, outdim)
    # bf16 MXU operands (and bf16 hidden sigmoid on v6e/v7x) with f32 accumulation
    # -> loosened tolerance vs the pure-f32 reference.
    assert jnp.allclose(out, ref, atol=3e-2, rtol=3e-2), "mismatch vs reference"

    print("KERNEL_OK")
</pallas_src>

<mosaic_0001>
module attributes {stable_mosaic.version = 11 : i64} {
  func.func @kernel(%arg0: i32, %arg1: memref<16x4xf32, #tpu.memory_space<vmem>>, %arg2: memref<4x128xbf16, #tpu.memory_space<vmem>>, %arg3: memref<1x128xf32, #tpu.memory_space<vmem>>, %arg4: memref<128x128xbf16, #tpu.memory_space<vmem>>, %arg5: memref<1x128xf32, #tpu.memory_space<vmem>>, %arg6: memref<128x128xbf16, #tpu.memory_space<vmem>>, %arg7: memref<1x128xf32, #tpu.memory_space<vmem>>, %arg8: memref<128x128xbf16, #tpu.memory_space<vmem>>, %arg9: memref<1x128xf32, #tpu.memory_space<vmem>>, %arg10: memref<16x128xf32, #tpu.memory_space<vmem>>) attributes {dimension_semantics = [#tpu.dimension_semantics<parallel>], iteration_bounds = array<i64: 1>, scalar_prefetch = 0 : i64, scratch_operands = 0 : i64, tpu.core_type = #tpu.core_type<tc>, window_params = [{transform_indices = @transform_0, window_bounds = array<i64: 16, 4>}, {pipeline_mode = #tpu.pipeline_mode<synchronous>, transform_indices = @transform_1, window_bounds = array<i64: 4, 128>}, {pipeline_mode = #tpu.pipeline_mode<synchronous>, transform_indices = @transform_2, window_bounds = array<i64: 1, 128>}, {pipeline_mode = #tpu.pipeline_mode<synchronous>, transform_indices = @transform_3, window_bounds = array<i64: 128, 128>}, {pipeline_mode = #tpu.pipeline_mode<synchronous>, transform_indices = @transform_4, window_bounds = array<i64: 1, 128>}, {pipeline_mode = #tpu.pipeline_mode<synchronous>, transform_indices = @transform_5, window_bounds = array<i64: 128, 128>}, {pipeline_mode = #tpu.pipeline_mode<synchronous>, transform_indices = @transform_6, window_bounds = array<i64: 1, 128>}, {pipeline_mode = #tpu.pipeline_mode<synchronous>, transform_indices = @transform_7, window_bounds = array<i64: 128, 128>}, {pipeline_mode = #tpu.pipeline_mode<synchronous>, transform_indices = @transform_8, window_bounds = array<i64: 1, 128>}, {transform_indices = @transform_9, window_bounds = array<i64: 16, 128>}]} {
    %c0 = arith.constant 0 : index
    %c0_0 = arith.constant 0 : index
    %0 = vector.load %arg1[%c0, %c0_0] : memref<16x4xf32, #tpu.memory_space<vmem>>, vector<16x4xf32>
    %1 = arith.truncf %0 : vector<16x4xf32> to vector<16x4xbf16>
    %c0_1 = arith.constant 0 : index
    %c0_2 = arith.constant 0 : index
    %2 = vector.load %arg2[%c0_1, %c0_2] : memref<4x128xbf16, #tpu.memory_space<vmem>>, vector<4x128xbf16>
    %c0_3 = arith.constant 0 : index
    %c0_4 = arith.constant 0 : index
    %3 = vector.load %arg3[%c0_3, %c0_4] : memref<1x128xf32, #tpu.memory_space<vmem>>, vector<1x128xf32>
    %cst = arith.constant dense<0.000000e+00> : vector<16x128xf32>
    %4 = tpu.matmul %1, %2, %cst {dimension_numbers = #tpu.dot_dimension_numbers<[1], [0], [0], [1], [0, 0, 1, 1], [], []>} : vector<16x4xbf16>, vector<4x128xbf16>, vector<16x128xf32> -> vector<16x128xf32>
    %5 = vector.broadcast %3 : vector<1x128xf32> to vector<16x128xf32>
    %6 = arith.addf %4, %5 : vector<16x128xf32>
    %cst_5 = arith.constant 5.000000e-01 : f32
    %7 = vector.broadcast %cst_5 : f32 to vector<16x128xf32>
    %8 = arith.mulf %7, %6 : vector<16x128xf32>
    %9 = math.tanh %8 : vector<16x128xf32>
    %cst_6 = arith.constant 5.000000e-01 : f32
    %10 = vector.broadcast %cst_6 : f32 to vector<16x128xf32>
    %11 = arith.mulf %10, %9 : vector<16x128xf32>
    %cst_7 = arith.constant 5.000000e-01 : f32
    %12 = vector.broadcast %cst_7 : f32 to vector<16x128xf32>
    %13 = arith.addf %11, %12 : vector<16x128xf32>
    %14 = arith.truncf %13 : vector<16x128xf32> to vector<16x128xbf16>
    %c0_8 = arith.constant 0 : index
    %c0_9 = arith.constant 0 : index
    %15 = vector.load %arg4[%c0_8, %c0_9] : memref<128x128xbf16, #tpu.memory_space<vmem>>, vector<128x128xbf16>
    %c0_10 = arith.constant 0 : index
    %c0_11 = arith.constant 0 : index
    %16 = vector.load %arg5[%c0_10, %c0_11] : memref<1x128xf32, #tpu.memory_space<vmem>>, vector<1x128xf32>
    %cst_12 = arith.constant dense<0.000000e+00> : vector<16x128xf32>
    %17 = tpu.matmul %14, %15, %cst_12 {dimension_numbers = #tpu.dot_dimension_numbers<[1], [0], [0], [1], [0, 0, 1, 1], [], []>} : vector<16x128xbf16>, vector<128x128xbf16>, vector<16x128xf32> -> vector<16x128xf32>
    %18 = vector.broadcast %16 : vector<1x128xf32> to vector<16x128xf32>
    %19 = arith.addf %17, %18 : vector<16x128xf32>
    %cst_13 = arith.constant 5.000000e-01 : f32
    %20 = vector.broadcast %cst_13 : f32 to vector<16x128xf32>
    %21 = arith.mulf %20, %19 : vector<16x128xf32>
    %22 = math.tanh %21 : vector<16x128xf32>
    %cst_14 = arith.constant 5.000000e-01 : f32
    %23 = vector.broadcast %cst_14 : f32 to vector<16x128xf32>
    %24 = arith.mulf %23, %22 : vector<16x128xf32>
    %cst_15 = arith.constant 5.000000e-01 : f32
    %25 = vector.broadcast %cst_15 : f32 to vector<16x128xf32>
    %26 = arith.addf %24, %25 : vector<16x128xf32>
    %27 = arith.truncf %26 : vector<16x128xf32> to vector<16x128xbf16>
    %c0_16 = arith.constant 0 : index
    %c0_17 = arith.constant 0 : index
    %28 = vector.load %arg6[%c0_16, %c0_17] : memref<128x128xbf16, #tpu.memory_space<vmem>>, vector<128x128xbf16>
    %c0_18 = arith.constant 0 : index
    %c0_19 = arith.constant 0 : index
    %29 = vector.load %arg7[%c0_18, %c0_19] : memref<1x128xf32, #tpu.memory_space<vmem>>, vector<1x128xf32>
    %cst_20 = arith.constant dense<0.000000e+00> : vector<16x128xf32>
    %30 = tpu.matmul %27, %28, %cst_20 {dimension_numbers = #tpu.dot_dimension_numbers<[1], [0], [0], [1], [0, 0, 1, 1], [], []>} : vector<16x128xbf16>, vector<128x128xbf16>, vector<16x128xf32> -> vector<16x128xf32>
    %31 = vector.broadcast %29 : vector<1x128xf32> to vector<16x128xf32>
    %32 = arith.addf %30, %31 : vector<16x128xf32>
    %cst_21 = arith.constant 5.000000e-01 : f32
    %33 = vector.broadcast %cst_21 : f32 to vector<16x128xf32>
    %34 = arith.mulf %33, %32 : vector<16x128xf32>
    %35 = math.tanh %34 : vector<16x128xf32>
    %cst_22 = arith.constant 5.000000e-01 : f32
    %36 = vector.broadcast %cst_22 : f32 to vector<16x128xf32>
    %37 = arith.mulf %36, %35 : vector<16x128xf32>
    %cst_23 = arith.constant 5.000000e-01 : f32
    %38 = vector.broadcast %cst_23 : f32 to vector<16x128xf32>
    %39 = arith.addf %37, %38 : vector<16x128xf32>
    %40 = arith.truncf %39 : vector<16x128xf32> to vector<16x128xbf16>
    %c0_24 = arith.constant 0 : index
    %c0_25 = arith.constant 0 : index
    %41 = vector.load %arg8[%c0_24, %c0_25] : memref<128x128xbf16, #tpu.memory_space<vmem>>, vector<128x128xbf16>
    %c0_26 = arith.constant 0 : index
    %c0_27 = arith.constant 0 : index
    %42 = vector.load %arg9[%c0_26, %c0_27] : memref<1x128xf32, #tpu.memory_space<vmem>>, vector<1x128xf32>
    %cst_28 = arith.constant dense<0.000000e+00> : vector<16x128xf32>
    %43 = tpu.matmul %40, %41, %cst_28 {dimension_numbers = #tpu.dot_dimension_numbers<[1], [0], [0], [1], [0, 0, 1, 1], [], []>} : vector<16x128xbf16>, vector<128x128xbf16>, vector<16x128xf32> -> vector<16x128xf32>
    %44 = vector.broadcast %42 : vector<1x128xf32> to vector<16x128xf32>
    %45 = arith.addf %43, %44 : vector<16x128xf32>
    %cst_29 = arith.constant 5.000000e-01 : f32
    %46 = vector.broadcast %cst_29 : f32 to vector<16x128xf32>
    %47 = arith.mulf %46, %45 : vector<16x128xf32>
    %48 = math.tanh %47 : vector<16x128xf32>
    %cst_30 = arith.constant 5.000000e-01 : f32
    %49 = vector.broadcast %cst_30 : f32 to vector<16x128xf32>
    %50 = arith.mulf %49, %48 : vector<16x128xf32>
    %cst_31 = arith.constant 5.000000e-01 : f32
    %51 = vector.broadcast %cst_31 : f32 to vector<16x128xf32>
    %52 = arith.addf %50, %51 : vector<16x128xf32>
    %c0_32 = arith.constant 0 : index
    %c0_33 = arith.constant 0 : index
    %53 = vector.load %arg10[%c0_32, %c0_33] : memref<16x128xf32, #tpu.memory_space<vmem>>, vector<16x128xf32>
    tpu.vector_store %arg10[%c0_32, %c0_33], %52 {strides = array<i32>} : memref<16x128xf32, #tpu.memory_space<vmem>>, vector<16x128xf32>,
    return
  }
  func.func @transform_0(%arg0: i32) -> (i32, i32) {
    %c0_i32 = arith.constant 0 : i32
    %c0_i32_0 = arith.constant 0 : i32
    return %arg0, %c0_i32 : i32, i32
  }
  func.func @transform_1(%arg0: i32) -> (i32, i32) {
    %c0_i32 = arith.constant 0 : i32
    %c0_i32_0 = arith.constant 0 : i32
    %c0_i32_1 = arith.constant 0 : i32
    return %c0_i32, %c0_i32_0 : i32, i32
  }
  func.func @transform_2(%arg0: i32) -> (i32, i32) {
    %c0_i32 = arith.constant 0 : i32
    %c0_i32_0 = arith.constant 0 : i32
    %c0_i32_1 = arith.constant 0 : i32
    return %c0_i32, %c0_i32_0 : i32, i32
  }
  func.func @transform_3(%arg0: i32) -> (i32, i32) {
    %c0_i32 = arith.constant 0 : i32
    %c0_i32_0 = arith.constant 0 : i32
    %c0_i32_1 = arith.constant 0 : i32
    return %c0_i32, %c0_i32_0 : i32, i32
  }
  func.func @transform_4(%arg0: i32) -> (i32, i32) {
    %c0_i32 = arith.constant 0 : i32
    %c0_i32_0 = arith.constant 0 : i32
    %c0_i32_1 = arith.constant 0 : i32
    return %c0_i32, %c0_i32_0 : i32, i32
  }
  func.func @transform_5(%arg0: i32) -> (i32, i32) {
    %c0_i32 = arith.constant 0 : i32
    %c0_i32_0 = arith.constant 0 : i32
    %c0_i32_1 = arith.constant 0 : i32
    return %c0_i32, %c0_i32_0 : i32, i32
  }
  func.func @transform_6(%arg0: i32) -> (i32, i32) {
    %c0_i32 = arith.constant 0 : i32
    %c0_i32_0 = arith.constant 0 : i32
    %c0_i32_1 = arith.constant 0 : i32
    return %c0_i32, %c0_i32_0 : i32, i32
  }
  func.func @transform_7(%arg0: i32) -> (i32, i32) {
    %c0_i32 = arith.constant 0 : i32
    %c0_i32_0 = arith.constant 0 : i32
    %c0_i32_1 = arith.constant 0 : i32
    return %c0_i32, %c0_i32_0 : i32, i32
  }
  func.func @transform_8(%arg0: i32) -> (i32, i32) {
    %c0_i32 = arith.constant 0 : i32
    %c0_i32_0 = arith.constant 0 : i32
    %c0_i32_1 = arith.constant 0 : i32
    return %c0_i32, %c0_i32_0 : i32, i32
  }
  func.func @transform_9(%arg0: i32) -> (i32, i32) {
    %c0_i32 = arith.constant 0 : i32
    %c0_i32_0 = arith.constant 0 : i32
    return %arg0, %c0_i32 : i32, i32
  }
}

module attributes {stable_mosaic.version = 11 : i64} {
  func.func @kernel(%arg0: i32, %arg1: memref<16x4xf32, #tpu.memory_space<vmem>>, %arg2: memref<4x128xbf16, #tpu.memory_space<vmem>>, %arg3: memref<1x128xf32, #tpu.memory_space<vmem>>, %arg4: memref<128x128xbf16, #tpu.memory_space<vmem>>, %arg5: memref<1x128xf32, #tpu.memory_space<vmem>>, %arg6: memref<128x128xbf16, #tpu.memory_space<vmem>>, %arg7: memref<1x128xf32, #tpu.memory_space<vmem>>, %arg8: memref<128x128xbf16, #tpu.memory_space<vmem>>, %arg9: memref<1x128xf32, #tpu.memory_space<vmem>>, %arg10: memref<16x128xf32, #tpu.memory_space<vmem>>) attributes {dimension_semantics = [#tpu.dimension_semantics<parallel>], iteration_bounds = array<i64: 1>, scalar_prefetch = 0 : i64, scratch_operands = 0 : i64, tpu.core_type = #tpu.core_type<tc>, window_params = [{transform_indices = @transform_0, window_bounds = array<i64: 16, 4>}, {pipeline_mode = #tpu.pipeline_mode<synchronous>, transform_indices = @transform_1, window_bounds = array<i64: 4, 128>}, {pipeline_mode = #tpu.pipeline_mode<synchronous>, transform_indices = @transform_2, window_bounds = array<i64: 1, 128>}, {pipeline_mode = #tpu.pipeline_mode<synchronous>, transform_indices = @transform_3, window_bounds = array<i64: 128, 128>}, {pipeline_mode = #tpu.pipeline_mode<synchronous>, transform_indices = @transform_4, window_bounds = array<i64: 1, 128>}, {pipeline_mode = #tpu.pipeline_mode<synchronous>, transform_indices = @transform_5, window_bounds = array<i64: 128, 128>}, {pipeline_mode = #tpu.pipeline_mode<synchronous>, transform_indices = @transform_6, window_bounds = array<i64: 1, 128>}, {pipeline_mode = #tpu.pipeline_mode<synchronous>, transform_indices = @transform_7, window_bounds = array<i64: 128, 128>}, {pipeline_mode = #tpu.pipeline_mode<synchronous>, transform_indices = @transform_8, window_bounds = array<i64: 1, 128>}, {transform_indices = @transform_9, window_bounds = array<i64: 16, 128>}]} {
    %c0 = arith.constant 0 : index
    %c0_0 = arith.constant 0 : index
    %0 = vector.load %arg1[%c0, %c0_0] : memref<16x4xf32, #tpu.memory_space<vmem>>, vector<16x4xf32>
    %1 = arith.truncf %0 : vector<16x4xf32> to vector<16x4xbf16>
    %c0_1 = arith.constant 0 : index
    %c0_2 = arith.constant 0 : index
    %2 = vector.load %arg2[%c0_1, %c0_2] : memref<4x128xbf16, #tpu.memory_space<vmem>>, vector<4x128xbf16>
    %c0_3 = arith.constant 0 : index
    %c0_4 = arith.constant 0 : index
    %3 = vector.load %arg3[%c0_3, %c0_4] : memref<1x128xf32, #tpu.memory_space<vmem>>, vector<1x128xf32>
    %cst = arith.constant dense<0.000000e+00> : vector<16x128xf32>
    %4 = tpu.matmul %1, %2, %cst {dimension_numbers = #tpu.dot_dimension_numbers<[1], [0], [0], [1], [0, 0, 1, 1], [], []>} : vector<16x4xbf16>, vector<4x128xbf16>, vector<16x128xf32> -> vector<16x128xf32>
    %5 = vector.broadcast %3 : vector<1x128xf32> to vector<16x128xf32>
    %6 = arith.addf %4, %5 : vector<16x128xf32>
    %cst_5 = arith.constant 5.000000e-01 : f32
    %7 = vector.broadcast %cst_5 : f32 to vector<16x128xf32>
    %8 = arith.mulf %7, %6 : vector<16x128xf32>
    %9 = math.tanh %8 : vector<16x128xf32>
    %cst_6 = arith.constant 5.000000e-01 : f32
    %10 = vector.broadcast %cst_6 : f32 to vector<16x128xf32>
    %11 = arith.mulf %10, %9 : vector<16x128xf32>
    %cst_7 = arith.constant 5.000000e-01 : f32
    %12 = vector.broadcast %cst_7 : f32 to vector<16x128xf32>
    %13 = arith.addf %11, %12 : vector<16x128xf32>
    %14 = arith.truncf %13 : vector<16x128xf32> to vector<16x128xbf16>
    %c0_8 = arith.constant 0 : index
    %c0_9 = arith.constant 0 : index
    %15 = vector.load %arg4[%c0_8, %c0_9] : memref<128x128xbf16, #tpu.memory_space<vmem>>, vector<128x128xbf16>
    %c0_10 = arith.constant 0 : index
    %c0_11 = arith.constant 0 : index
    %16 = vector.load %arg5[%c0_10, %c0_11] : memref<1x128xf32, #tpu.memory_space<vmem>>, vector<1x128xf32>
    %cst_12 = arith.constant dense<0.000000e+00> : vector<16x128xf32>
    %17 = tpu.matmul %14, %15, %cst_12 {dimension_numbers = #tpu.dot_dimension_numbers<[1], [0], [0], [1], [0, 0, 1, 1], [], []>} : vector<16x128xbf16>, vector<128x128xbf16>, vector<16x128xf32> -> vector<16x128xf32>
    %18 = vector.broadcast %16 : vector<1x128xf32> to vector<16x128xf32>
    %19 = arith.addf %17, %18 : vector<16x128xf32>
    %cst_13 = arith.constant 5.000000e-01 : f32
    %20 = vector.broadcast %cst_13 : f32 to vector<16x128xf32>
    %21 = arith.mulf %20, %19 : vector<16x128xf32>
    %22 = math.tanh %21 : vector<16x128xf32>
    %cst_14 = arith.constant 5.000000e-01 : f32
    %23 = vector.broadcast %cst_14 : f32 to vector<16x128xf32>
    %24 = arith.mulf %23, %22 : vector<16x128xf32>
    %cst_15 = arith.constant 5.000000e-01 : f32
    %25 = vector.broadcast %cst_15 : f32 to vector<16x128xf32>
    %26 = arith.addf %24, %25 : vector<16x128xf32>
    %27 = arith.truncf %26 : vector<16x128xf32> to vector<16x128xbf16>
    %c0_16 = arith.constant 0 : index
    %c0_17 = arith.constant 0 : index
    %28 = vector.load %arg6[%c0_16, %c0_17] : memref<128x128xbf16, #tpu.memory_space<vmem>>, vector<128x128xbf16>
    %c0_18 = arith.constant 0 : index
    %c0_19 = arith.constant 0 : index
    %29 = vector.load %arg7[%c0_18, %c0_19] : memref<1x128xf32, #tpu.memory_space<vmem>>, vector<1x128xf32>
    %cst_20 = arith.constant dense<0.000000e+00> : vector<16x128xf32>
    %30 = tpu.matmul %27, %28, %cst_20 {dimension_numbers = #tpu.dot_dimension_numbers<[1], [0], [0], [1], [0, 0, 1, 1], [], []>} : vector<16x128xbf16>, vector<128x128xbf16>, vector<16x128xf32> -> vector<16x128xf32>
    %31 = vector.broadcast %29 : vector<1x128xf32> to vector<16x128xf32>
    %32 = arith.addf %30, %31 : vector<16x128xf32>
    %cst_21 = arith.constant 5.000000e-01 : f32
    %33 = vector.broadcast %cst_21 : f32 to vector<16x128xf32>
    %34 = arith.mulf %33, %32 : vector<16x128xf32>
    %35 = math.tanh %34 : vector<16x128xf32>
    %cst_22 = arith.constant 5.000000e-01 : f32
    %36 = vector.broadcast %cst_22 : f32 to vector<16x128xf32>
    %37 = arith.mulf %36, %35 : vector<16x128xf32>
    %cst_23 = arith.constant 5.000000e-01 : f32
    %38 = vector.broadcast %cst_23 : f32 to vector<16x128xf32>
    %39 = arith.addf %37, %38 : vector<16x128xf32>
    %40 = arith.truncf %39 : vector<16x128xf32> to vector<16x128xbf16>
    %c0_24 = arith.constant 0 : index
    %c0_25 = arith.constant 0 : index
    %41 = vector.load %arg8[%c0_24, %c0_25] : memref<128x128xbf16, #tpu.memory_space<vmem>>, vector<128x128xbf16>
    %c0_26 = arith.constant 0 : index
    %c0_27 = arith.constant 0 : index
    %42 = vector.load %arg9[%c0_26, %c0_27] : memref<1x128xf32, #tpu.memory_space<vmem>>, vector<1x128xf32>
    %cst_28 = arith.constant dense<0.000000e+00> : vector<16x128xf32>
    %43 = tpu.matmul %40, %41, %cst_28 {dimension_numbers = #tpu.dot_dimension_numbers<[1], [0], [0], [1], [0, 0, 1, 1], [], []>} : vector<16x128xbf16>, vector<128x128xbf16>, vector<16x128xf32> -> vector<16x128xf32>
    %44 = vector.broadcast %42 : vector<1x128xf32> to vector<16x128xf32>
    %45 = arith.addf %43, %44 : vector<16x128xf32>
    %cst_29 = arith.constant 5.000000e-01 : f32
    %46 = vector.broadcast %cst_29 : f32 to vector<16x128xf32>
    %47 = arith.mulf %46, %45 : vector<16x128xf32>
    %48 = math.tanh %47 : vector<16x128xf32>
    %cst_30 = arith.constant 5.000000e-01 : f32
    %49 = vector.broadcast %cst_30 : f32 to vector<16x128xf32>
    %50 = arith.mulf %49, %48 : vector<16x128xf32>
    %cst_31 = arith.constant 5.000000e-01 : f32
    %51 = vector.broadcast %cst_31 : f32 to vector<16x128xf32>
    %52 = arith.addf %50, %51 : vector<16x128xf32>
    %c0_32 = arith.constant 0 : index
    %c0_33 = arith.constant 0 : index
    %53 = vector.load %arg10[%c0_32, %c0_33] : memref<16x128xf32, #tpu.memory_space<vmem>>, vector<16x128xf32>
    tpu.vector_store %arg10[%c0_32, %c0_33], %52 {strides = array<i32>} : memref<16x128xf32, #tpu.memory_space<vmem>>, vector<16x128xf32>,
    return
  }
  func.func @transform_0(%arg0: i32) -> (i32, i32) {
    %c0_i32 = arith.constant 0 : i32
    %c0_i32_0 = arith.constant 0 : i32
    return %arg0, %c0_i32 : i32, i32
  }
  func.func @transform_1(%arg0: i32) -> (i32, i32) {
    %c0_i32 = arith.constant 0 : i32
    %c0_i32_0 = arith.constant 0 : i32
    %c0_i32_1 = arith.constant 0 : i32
    return %c0_i32, %c0_i32_0 : i32, i32
  }
  func.func @transform_2(%arg0: i32) -> (i32, i32) {
    %c0_i32 = arith.constant 0 : i32
    %c0_i32_0 = arith.constant 0 : i32
    %c0_i32_1 = arith.constant 0 : i32
    return %c0_i32, %c0_i32_0 : i32, i32
  }
  func.func @transform_3(%arg0: i32) -> (i32, i32) {
    %c0_i32 = arith.constant 0 : i32
    %c0_i32_0 = arith.constant 0 : i32
    %c0_i32_1 = arith.constant 0 : i32
    return %c0_i32, %c0_i32_0 : i32, i32
  }
  func.func @transform_4(%arg0: i32) -> (i32, i32) {
    %c0_i32 = arith.constant 0 : i32
    %c0_i32_0 = arith.constant 0 : i32
    %c0_i32_1 = arith.constant 0 : i32
    return %c0_i32, %c0_i32_0 : i32, i32
  }
  func.func @transform_5(%arg0: i32) -> (i32, i32) {
    %c0_i32 = arith.constant 0 : i32
    %c0_i32_0 = arith.constant 0 : i32
    %c0_i32_1 = arith.constant 0 : i32
    return %c0_i32, %c0_i32_0 : i32, i32
  }
  func.func @transform_6(%arg0: i32) -> (i32, i32) {
    %c0_i32 = arith.constant 0 : i32
    %c0_i32_0 = arith.constant 0 : i32
    %c0_i32_1 = arith.constant 0 : i32
    return %c0_i32, %c0_i32_0 : i32, i32
  }
  func.func @transform_7(%arg0: i32) -> (i32, i32) {
    %c0_i32 = arith.constant 0 : i32
    %c0_i32_0 = arith.constant 0 : i32
    %c0_i32_1 = arith.constant 0 : i32
    return %c0_i32, %c0_i32_0 : i32, i32
  }
  func.func @transform_8(%arg0: i32) -> (i32, i32) {
    %c0_i32 = arith.constant 0 : i32
    %c0_i32_0 = arith.constant 0 : i32
    %c0_i32_1 = arith.constant 0 : i32
    return %c0_i32, %c0_i32_0 : i32, i32
  }
  func.func @transform_9(%arg0: i32) -> (i32, i32) {
    %c0_i32 = arith.constant 0 : i32
    %c0_i32_0 = arith.constant 0 : i32
    return %arg0, %c0_i32 : i32, i32
  }
}

</mosaic_0001>

<llo_original>
// kernel: tpu_custom_call.1
$region0: #{tpu_custom_call.1}
  #allocation0 [shape = 'u32[]', space=smem, size = 0x4, offset = 0x4, fixed_abs, tag = 'smem constant byte address 0x4 - core index']
  #allocation1 [shape = 'u32[144,128]{1,0:T(1,128)}', space=vmem, size = 0x12000, scoped, tag = 'internal scratch']
  %s0 = inlined_call_operand.vmem [shape: f32[16,4], index: 0, kind: input, shape index: {}]
  %s1 = inlined_call_operand.vmem [shape: bf16[4,128], index: 1, kind: input, shape index: {}]
  %s2 = inlined_call_operand.vmem [shape: f32[1,128], index: 2, kind: input, shape index: {}]
  %s3 = inlined_call_operand.hbm [shape: bf16[128,128], index: 3, kind: input, shape index: {}]
  %s4 = inlined_call_operand.vmem [shape: f32[1,128], index: 4, kind: input, shape index: {}]
  %s5 = inlined_call_operand.hbm [shape: bf16[128,128], index: 5, kind: input, shape index: {}]
  %s6 = inlined_call_operand.vmem [shape: f32[1,128], index: 6, kind: input, shape index: {}]
  %s7 = inlined_call_operand.hbm [shape: bf16[128,128], index: 7, kind: input, shape index: {}]
  %s8 = inlined_call_operand.vmem [shape: f32[1,128], index: 8, kind: input, shape index: {}]
  %s9 = inlined_call_operand.hbm [shape: f32[16,128], index: 9, kind: output, shape index: {}]
  %s10 = sld [smem:[#allocation0]]
  $region58: #{tpu_custom_call.1} parent=0
    _
  %s12 = ssub.s32 1, %s10
  %s13 = scalar_select 0, %s12, %s10
  $region1: #{tpu_custom_call.1} parent=0
    #allocation2 [shape = 'u8[32768]{0}', space=vmem, size = 0x8000, scoped, tag = 'input window, operand 3, single buffered']
    #allocation3 [shape = 's32[1]{0}', space=sflag, size = 0x4, scoped, tag = 'scoped memory for tpu_custom_call.1']
    #allocation4 [shape = 's32[1]{0}', space=sflag, size = 0x4, scoped, tag = 'scoped memory for tpu_custom_call.1']
    #allocation5 [shape = 'u8[32768]{0}', space=vmem, size = 0x8000, scoped, tag = 'input window, operand 5, single buffered']
    #allocation6 [shape = 's32[1]{0}', space=sflag, size = 0x4, scoped, tag = 'scoped memory for tpu_custom_call.1']
    #allocation7 [shape = 'u8[32768]{0}', space=vmem, size = 0x8000, scoped, tag = 'input window, operand 7, single buffered']
    #allocation8 [shape = 'u8[8192]{0}', space=vmem, size = 0x2000, scoped, tag = 'output window, operand 0, single buffered']
    %14 = vsyncpa [#allocation3], 0
    %15 = vsyncpa [#allocation6], 0
    %16 = vsyncpa [#allocation4], 0
    // Predicated region
    $region2: #{tpu_custom_call.1} parent=1 // pred_check
      _
    $region3: #{tpu_custom_call.1} parent=1 // pred_check_branch
      %18 = sbr.rel (0) target = $region5
    $region4: #{tpu_custom_call.1} parent=1 // pred_region
      _
    $region5: #{tpu_custom_call.1} parent=1 // pred_fallthru
      _
    // Predicated region
    $region6: #{tpu_custom_call.1} parent=1 // pred_check
      _
    $region7: #{tpu_custom_call.1} parent=1 // pred_check_branch
      %20 = sbr.rel (0) target = $region9
    $region8: #{tpu_custom_call.1} parent=1 // pred_region
      _
    $region9: #{tpu_custom_call.1} parent=1 // pred_fallthru
      _
    // Predicated region
    $region10: #{tpu_custom_call.1} parent=1 // pred_check
      _
    $region11: #{tpu_custom_call.1} parent=1 // pred_check_branch
      %22 = sbr.rel (0) target = $region13
    $region12: #{tpu_custom_call.1} parent=1 // pred_region
      _
    $region13: #{tpu_custom_call.1} parent=1 // pred_fallthru
      _
    // Predicated region
    $region14: #{tpu_custom_call.1} parent=1 // pred_check
      _
    $region15: #{tpu_custom_call.1} parent=1 // pred_check_branch
      %24 = sbr.rel (0) target = $region17
    $region16: #{tpu_custom_call.1} parent=1 // pred_region
      %s26 = ssub.s32 1024, 1024
      %27 = vsyncadd [#allocation3], %s26
      %s28 = sshll.u32 [#allocation2], 4
      %s29 = int_to_ptr.vmem [resolvable:$true] %s28
      %34 = dma.hbm_to_vmem [thread:$0]  %s3, 1024, %s29, [#allocation3], 64, 64, 4
    $region17: #{tpu_custom_call.1} parent=1 // pred_fallthru
      _
    // Predicated region
    $region18: #{tpu_custom_call.1} parent=1 // pred_check
      _
    $region19: #{tpu_custom_call.1} parent=1 // pred_check_branch
      %36 = sbr.rel (0) target = $region21
    $region20: #{tpu_custom_call.1} parent=1 // pred_region
      _
    $region21: #{tpu_custom_call.1} parent=1 // pred_fallthru
      _
    // Predicated region
    $region22: #{tpu_custom_call.1} parent=1 // pred_check
      _
    $region23: #{tpu_custom_call.1} parent=1 // pred_check_branch
      %38 = sbr.rel (0) target = $region25
    $region24: #{tpu_custom_call.1} parent=1 // pred_region
      %s40 = ssub.s32 1024, 1024
      %41 = vsyncadd [#allocation6], %s40
      %s42 = sshll.u32 [#allocation5], 4
      %s43 = int_to_ptr.vmem [resolvable:$true] %s42
      %48 = dma.hbm_to_vmem [thread:$0]  %s5, 1024, %s43, [#allocation6], 64, 64, 4
    $region25: #{tpu_custom_call.1} parent=1 // pred_fallthru
      _
    // Predicated region
    $region26: #{tpu_custom_call.1} parent=1 // pred_check
      _
    $region27: #{tpu_custom_call.1} parent=1 // pred_check_branch
      %50 = sbr.rel (0) target = $region29
    $region28: #{tpu_custom_call.1} parent=1 // pred_region
      _
    $region29: #{tpu_custom_call.1} parent=1 // pred_fallthru
      _
    // Predicated region
    $region30: #{tpu_custom_call.1} parent=1 // pred_check
      _
    $region31: #{tpu_custom_call.1} parent=1 // pred_check_branch
      %52 = sbr.rel (0) target = $region33
    $region32: #{tpu_custom_call.1} parent=1 // pred_region
      %s54 = ssub.s32 1024, 1024
      %55 = vsyncadd [#allocation6], %s54
      %s56 = sshll.u32 [#allocation7], 4
      %s57 = int_to_ptr.vmem [resolvable:$true] %s56
      %62 = dma.hbm_to_vmem [thread:$0]  %s7, 1024, %s57, [#allocation6], 64, 64, 4
    $region33: #{tpu_custom_call.1} parent=1 // pred_fallthru
      _
    // Predicated region
    $region34: #{tpu_custom_call.1} parent=1 // pred_check
      _
    $region35: #{tpu_custom_call.1} parent=1 // pred_check_branch
      %64 = sbr.rel (0) target = $region37
    $region36: #{tpu_custom_call.1} parent=1 // pred_region
      _
    $region37: #{tpu_custom_call.1} parent=1 // pred_fallthru
      _
    // Predicated region
    $region38: #{tpu_custom_call.1} parent=1 // pred_check
      _
    $region39: #{tpu_custom_call.1} parent=1 // pred_check_branch
      %66 = sbr.rel (0) target = $region41
    $region40: #{tpu_custom_call.1} parent=1 // pred_region
      %67 = dma.done [#allocation3], 1024
    $region41: #{tpu_custom_call.1} parent=1 // pred_fallthru
      _
    // Predicated region
    $region42: #{tpu_custom_call.1} parent=1 // pred_check
      _
    $region43: #{tpu_custom_call.1} parent=1 // pred_check_branch
      %69 = sbr.rel (0) target = $region45
    $region44: #{tpu_custom_call.1} parent=1 // pred_region
      %70 = dma.done [#allocation6], 1024
    $region45: #{tpu_custom_call.1} parent=1 // pred_fallthru
      _
    // Predicated region
    $region46: #{tpu_custom_call.1} parent=1 // pred_check
      _
    $region47: #{tpu_custom_call.1} parent=1 // pred_check_branch
      %72 = sbr.rel (0) target = $region49
    $region48: #{tpu_custom_call.1} parent=1 // pred_region
      %73 = dma.done [#allocation6], 1024
    $region49: #{tpu_custom_call.1} parent=1 // pred_fallthru
      _
    %v75 = vld [vmem:[%s0] sm:$0xff]
    %v76 = vld [vmem:[%s0 + $0x8] sm:$0xff]
    %v77 = vpack.c.bf16 %v76, %v75
    %v78 = vld [vmem:[%s1] sm:$0x3]
    %v79 = vld [vmem:[%s2] sm:$0x1]
    %v81 = vlaneseq
    %v82 = vshrl.u32 %v81, 7
    %v83 = vsub.s32 0, %v82
    %v84 = vrot.slane %v79, %v83
    %vm86 = vcmask 31744
    %v88 = vsel %vm86, %v77, 0
    %vm90 = vcmask 1041408
    %v92 = vsel %vm90, %v78, 0
    %94 = vmatprep.subr.bf16.mxu0 0
    %95 = vmatpush1.bf16.msra.mxu0 %v92
    %96 = vmatprep.subr.bf16.mxu0 0
    %97 = vmatpush1.bf16.msra.mxu0 0
    %98 = vmatprep.subr.bf16.mxu0 0
    %99 = vmatpush1.bf16.msra.mxu0 0
    %100 = vmatprep.subr.bf16.mxu0 0
    %101 = vmatpush1.bf16.msra.mxu0 0
    %102 = vmatprep.subr.bf16.mxu0 0
    %103 = vmatpush1.bf16.msra.mxu0 0
    %104 = vmatprep.subr.bf16.mxu0 0
    %105 = vmatpush1.bf16.msra.mxu0 0
    %106 = vmatprep.subr.bf16.mxu0 0
    %107 = vmatpush1.bf16.msra.mxu0 0
    %108 = vmatprep.subr.bf16.mxu0 0
    %109 = vmatpush1.bf16.msra.mxu0 0
    %110 = vmatprep.subr.bf16.mxu0 0
    %111 = vmatpush1.bf16.msra.mxu0 0
    %112 = vmatprep.subr.bf16.mxu0 0
    %113 = vmatpush1.bf16.msra.mxu0 0
    %114 = vmatprep.subr.bf16.mxu0 0
    %115 = vmatpush1.bf16.msra.mxu0 0
    %116 = vmatprep.subr.bf16.mxu0 0
    %117 = vmatpush1.bf16.msra.mxu0 0
    %118 = vmatprep.subr.bf16.mxu0 0
    %119 = vmatpush1.bf16.msra.mxu0 0
    %120 = vmatprep.subr.bf16.mxu0 0
    %121 = vmatpush1.bf16.msra.mxu0 0
    %122 = vmatprep.subr.bf16.mxu0 0
    %123 = vmatpush1.bf16.msra.mxu0 0
    %124 = vmatprep.subr.bf16.mxu0 0
    %125 = vmatpush1.bf16.msra.mxu0 0
    %126 = vmatprep.mubr.bf16.mxu0 0
    %127 = vmatmul.mubr.bf16.gmra.mrb[0].mxu0 %v88
    %v128 = vpop.f32.mrb[0].mxu0
    %v129 = vadd.f32 %v84, %v128
    %v130 = vpop.f32.mrb[0].mxu0
    %v131 = vpop.f32.mrb[0].mxu0
    %v132 = vadd.f32 %v84, %v131
    %v133 = vpop.f32.mrb[0].mxu0
    %134 = vdwg.mxu0
    %v135 = vmul.f32 %v129, 0.5
    %v136 = vmul.f32 %v132, 0.5
    %v137 = vtanh.pop %v135
    %v138 = vtanh.pop %v136
    %v139 = vmul.f32 %v137, 0.5
    %v140 = vmul.f32 %v138, 0.5
    %v141 = vadd.f32 %v139, 0.5
    %v142 = vadd.f32 %v140, 0.5
    %v143 = vpack.c.bf16 %v142, %v141
    %v144 = vld [vmem:[#allocation2] sm:$0xf]
    %v145 = vld [vmem:[#allocation2 + $0x4] sm:$0xf]
    %v146 = vld [vmem:[#allocation2 + $0x8] sm:$0xf]
    %v147 = vld [vmem:[#allocation2 + $0xc] sm:$0xf]
    %v148 = vld [vmem:[#allocation2 + $0x10] sm:$0xf]
    %v149 = vld [vmem:[#allocation2 + $0x14] sm:$0xf]
    %v150 = vld [vmem:[#allocation2 + $0x18] sm:$0xf]
    %v151 = vld [vmem:[#allocation2 + $0x1c] sm:$0xf]
    %v152 = vld [vmem:[#allocation2 + $0x20] sm:$0xf]
    %v153 = vld [vmem:[#allocation2 + $0x24] sm:$0xf]
    %v154 = vld [vmem:[#allocation2 + $0x28] sm:$0xf]
    %v155 = vld [vmem:[#allocation2 + $0x2c] sm:$0xf]
    %v156 = vld [vmem:[#allocation2 + $0x30] sm:$0xf]
    %v157 = vld [vmem:[#allocation2 + $0x34] sm:$0xf]
    %v158 = vld [vmem:[#allocation2 + $0x38] sm:$0xf]
    %v159 = vld [vmem:[#allocation2 + $0x3c] sm:$0xf]
    %v160 = vld [vmem:[%s4] sm:$0x1]
    %v162 = vlaneseq
    %v163 = vshrl.u32 %v162, 7
    %v164 = vsub.s32 0, %v163
    %v165 = vrot.slane %v160, %v164
    %v183 = vunpack.c.l.b16 %v144
    %v184 = vunpack.c.l.b16 %v145
    %v185 = vunpack.c.l.b16 %v146
    %v186 = vunpack.c.l.b16 %v147
    %v187 = vunpack.c.l.b16 %v148
    %v188 = vunpack.c.l.b16 %v149
    %v189 = vunpack.c.l.b16 %v150
    %v190 = vunpack.c.l.b16 %v151
    %v191 = vunpack.c.l.b16 %v152
    %v192 = vunpack.c.l.b16 %v153
    %v193 = vunpack.c.l.b16 %v154
    %v194 = vunpack.c.l.b16 %v155
    %v195 = vunpack.c.l.b16 %v156
    %v196 = vunpack.c.l.b16 %v157
    %v197 = vunpack.c.l.b16 %v158
    %v198 = vunpack.c.l.b16 %v159
    %v199 = vpack.c.b16 %v184, %v183
    %v200 = vpack.c.b16 %v186, %v185
    %v201 = vpack.c.b16 %v188, %v187
    %v202 = vpack.c.b16 %v190, %v189
    %v203 = vpack.c.b16 %v192, %v191
    %v204 = vpack.c.b16 %v194, %v193
    %v205 = vpack.c.b16 %v196, %v195
    %v206 = vpack.c.b16 %v198, %v197
    %215 = vmatprep.subr.bf16.mxu0 0
    %216 = vmatpush1.bf16.msra.mxu0 %v199
    %217 = vmatprep.subr.bf16.mxu0 0
    %218 = vmatpush1.bf16.msra.mxu0 %v200
    %219 = vmatprep.subr.bf16.mxu0 0
    %220 = vmatpush1.bf16.msra.mxu0 %v201
    %221 = vmatprep.subr.bf16.mxu0 0
    %222 = vmatpush1.bf16.msra.mxu0 %v202
    %223 = vmatprep.subr.bf16.mxu0 0
    %224 = vmatpush1.bf16.msra.mxu0 %v203
    %225 = vmatprep.subr.bf16.mxu0 0
    %226 = vmatpush1.bf16.msra.mxu0 %v204
    %227 = vmatprep.subr.bf16.mxu0 0
    %228 = vmatpush1.bf16.msra.mxu0 %v205
    %229 = vmatprep.subr.bf16.mxu0 0
    %230 = vmatpush1.bf16.msra.mxu0 %v206
    %231 = vmatprep.subr.bf16.mxu0 0
    %232 = vmatpush1.bf16.msra.mxu0 0
    %233 = vmatprep.subr.bf16.mxu0 0
    %234 = vmatpush1.bf16.msra.mxu0 0
    %235 = vmatprep.subr.bf16.mxu0 0
    %236 = vmatpush1.bf16.msra.mxu0 0
    %237 = vmatprep.subr.bf16.mxu0 0
    %238 = vmatpush1.bf16.msra.mxu0 0
    %239 = vmatprep.subr.bf16.mxu0 0
    %240 = vmatpush1.bf16.msra.mxu0 0
    %241 = vmatprep.subr.bf16.mxu0 0
    %242 = vmatpush1.bf16.msra.mxu0 0
    %243 = vmatprep.subr.bf16.mxu0 0
    %244 = vmatpush1.bf16.msra.mxu0 0
    %245 = vmatprep.subr.bf16.mxu0 0
    %246 = vmatpush1.bf16.msra.mxu0 0
    %247 = vmatprep.mubr.bf16.mxu0 0
    %248 = vmatmul.mubr.bf16.gmra.mrb[0].mxu0 %v143
    %v249 = vpop.f32.mrb[0].mxu0
    %v250 = vadd.f32 %v165, %v249
    %v251 = vpop.f32.mrb[0].mxu0
    %v252 = vpop.f32.mrb[0].mxu0
    %v253 = vadd.f32 %v165, %v252
    %v254 = vpop.f32.mrb[0].mxu0
    %255 = vdwg.mxu0
    %v256 = vmul.f32 %v250, 0.5
    %v257 = vmul.f32 %v253, 0.5
    %v258 = vtanh.pop %v256
    %v259 = vtanh.pop %v257
    %v260 = vmul.f32 %v258, 0.5
    %v261 = vmul.f32 %v259, 0.5
    %v262 = vadd.f32 %v260, 0.5
    %v263 = vadd.f32 %v261, 0.5
    %v264 = vpack.c.bf16 %v263, %v262
    %v265 = vld [vmem:[#allocation5] sm:$0xf]
    %v266 = vld [vmem:[#allocation5 + $0x4] sm:$0xf]
    %v267 = vld [vmem:[#allocation5 + $0x8] sm:$0xf]
    %v268 = vld [vmem:[#allocation5 + $0xc] sm:$0xf]
    %v269 = vld [vmem:[#allocation5 + $0x10] sm:$0xf]
    %v270 = vld [vmem:[#allocation5 + $0x14] sm:$0xf]
    %v271 = vld [vmem:[#allocation5 + $0x18] sm:$0xf]
    %v272 = vld [vmem:[#allocation5 + $0x1c] sm:$0xf]
    %v273 = vld [vmem:[#allocation5 + $0x20] sm:$0xf]
    %v274 = vld [vmem:[#allocation5 + $0x24] sm:$0xf]
    %v275 = vld [vmem:[#allocation5 + $0x28] sm:$0xf]
    %v276 = vld [vmem:[#allocation5 + $0x2c] sm:$0xf]
    %v277 = vld [vmem:[#allocation5 + $0x30] sm:$0xf]
    %v278 = vld [vmem:[#allocation5 + $0x34] sm:$0xf]
    %v279 = vld [vmem:[#allocation5 + $0x38] sm:$0xf]
    %v280 = vld [vmem:[#allocation5 + $0x3c] sm:$0xf]
    %v281 = vld [vmem:[%s6] sm:$0x1]
    %v283 = vlaneseq
    %v284 = vshrl.u32 %v283, 7
    %v285 = vsub.s32 0, %v284
    %v286 = vrot.slane %v281, %v285
    %v304 = vunpack.c.l.b16 %v265
    %v305 = vunpack.c.l.b16 %v266
    %v306 = vunpack.c.l.b16 %v267
    %v307 = vunpack.c.l.b16 %v268
    %v308 = vunpack.c.l.b16 %v269
    %v309 = vunpack.c.l.b16 %v270
    %v310 = vunpack.c.l.b16 %v271
    %v311 = vunpack.c.l.b16 %v272
    %v312 = vunpack.c.l.b16 %v273
    %v313 = vunpack.c.l.b16 %v274
    %v314 = vunpack.c.l.b16 %v275
    %v315 = vunpack.c.l.b16 %v276
    %v316 = vunpack.c.l.b16 %v277
    %v317 = vunpack.c.l.b16 %v278
    %v318 = vunpack.c.l.b16 %v279
    %v319 = vunpack.c.l.b16 %v280
    %v320 = vpack.c.b16 %v305, %v304
    %v321 = vpack.c.b16 %v307, %v306
    %v322 = vpack.c.b16 %v309, %v308
    %v323 = vpack.c.b16 %v311, %v310
    %v324 = vpack.c.b16 %v313, %v312
    %v325 = vpack.c.b16 %v315, %v314
    %v326 = vpack.c.b16 %v317, %v316
    %v327 = vpack.c.b16 %v319, %v318
    %336 = vmatprep.subr.bf16.mxu0 0
    %337 = vmatpush1.bf16.msra.mxu0 %v320
    %338 = vmatprep.subr.bf16.mxu0 0
    %339 = vmatpush1.bf16.msra.mxu0 %v321
    %340 = vmatprep.subr.bf16.mxu0 0
    %341 = vmatpush1.bf16.msra.mxu0 %v322
    %342 = vmatprep.subr.bf16.mxu0 0
    %343 = vmatpush1.bf16.msra.mxu0 %v323
    %344 = vmatprep.subr.bf16.mxu0 0
    %345 = vmatpush1.bf16.msra.mxu0 %v324
    %346 = vmatprep.subr.bf16.mxu0 0
    %347 = vmatpush1.bf16.msra.mxu0 %v325
    %348 = vmatprep.subr.bf16.mxu0 0
    %349 = vmatpush1.bf16.msra.mxu0 %v326
    %350 = vmatprep.subr.bf16.mxu0 0
    %351 = vmatpush1.bf16.msra.mxu0 %v327
    %352 = vmatprep.subr.bf16.mxu0 0
    %353 = vmatpush1.bf16.msra.mxu0 0
    %354 = vmatprep.subr.bf16.mxu0 0
    %355 = vmatpush1.bf16.msra.mxu0 0
    %356 = vmatprep.subr.bf16.mxu0 0
    %357 = vmatpush1.bf16.msra.mxu0 0
    %358 = vmatprep.subr.bf16.mxu0 0
    %359 = vmatpush1.bf16.msra.mxu0 0
    %360 = vmatprep.subr.bf16.mxu0 0
    %361 = vmatpush1.bf16.msra.mxu0 0
    %362 = vmatprep.subr.bf16.mxu0 0
    %363 = vmatpush1.bf16.msra.mxu0 0
    %364 = vmatprep.subr.bf16.mxu0 0
    %365 = vmatpush1.bf16.msra.mxu0 0
    %366 = vmatprep.subr.bf16.mxu0 0
    %367 = vmatpush1.bf16.msra.mxu0 0
    %368 = vmatprep.mubr.bf16.mxu0 0
    %369 = vmatmul.mubr.bf16.gmra.mrb[0].mxu0 %v264
    %v370 = vpop.f32.mrb[0].mxu0
    %v371 = vadd.f32 %v286, %v370
    %v372 = vpop.f32.mrb[0].mxu0
    %v373 = vpop.f32.mrb[0].mxu0
    %v374 = vadd.f32 %v286, %v373
    %v375 = vpop.f32.mrb[0].mxu0
    %376 = vdwg.mxu0
    %v377 = vmul.f32 %v371, 0.5
    %v378 = vmul.f32 %v374, 0.5
    %v379 = vtanh.pop %v377
    %v380 = vtanh.pop %v378
    %v381 = vmul.f32 %v379, 0.5
    %v382 = vmul.f32 %v380, 0.5
    %v383 = vadd.f32 %v381, 0.5
    %v384 = vadd.f32 %v382, 0.5
    %v385 = vpack.c.bf16 %v384, %v383
    %v386 = vld [vmem:[#allocation7] sm:$0xf]
    %v387 = vld [vmem:[#allocation7 + $0x4] sm:$0xf]
    %v388 = vld [vmem:[#allocation7 + $0x8] sm:$0xf]
    %v389 = vld [vmem:[#allocation7 + $0xc] sm:$0xf]
    %v390 = vld [vmem:[#allocation7 + $0x10] sm:$0xf]
    %v391 = vld [vmem:[#allocation7 + $0x14] sm:$0xf]
    %v392 = vld [vmem:[#allocation7 + $0x18] sm:$0xf]
    %v393 = vld [vmem:[#allocation7 + $0x1c] sm:$0xf]
    %v394 = vld [vmem:[#allocation7 + $0x20] sm:$0xf]
    %v395 = vld [vmem:[#allocation7 + $0x24] sm:$0xf]
    %v396 = vld [vmem:[#allocation7 + $0x28] sm:$0xf]
    %v397 = vld [vmem:[#allocation7 + $0x2c] sm:$0xf]
    %v398 = vld [vmem:[#allocation7 + $0x30] sm:$0xf]
    %v399 = vld [vmem:[#allocation7 + $0x34] sm:$0xf]
    %v400 = vld [vmem:[#allocation7 + $0x38] sm:$0xf]
    %v401 = vld [vmem:[#allocation7 + $0x3c] sm:$0xf]
    %v402 = vld [vmem:[%s8] sm:$0x1]
    %v404 = vlaneseq
    %v405 = vshrl.u32 %v404, 7
    %v406 = vsub.s32 0, %v405
    %v407 = vrot.slane %v402, %v406
    %v425 = vunpack.c.l.b16 %v386
    %v426 = vunpack.c.l.b16 %v387
    %v427 = vunpack.c.l.b16 %v388
    %v428 = vunpack.c.l.b16 %v389
    %v429 = vunpack.c.l.b16 %v390
    %v430 = vunpack.c.l.b16 %v391
    %v431 = vunpack.c.l.b16 %v392
    %v432 = vunpack.c.l.b16 %v393
    %v433 = vunpack.c.l.b16 %v394
    %v434 = vunpack.c.l.b16 %v395
    %v435 = vunpack.c.l.b16 %v396
    %v436 = vunpack.c.l.b16 %v397
    %v437 = vunpack.c.l.b16 %v398
    %v438 = vunpack.c.l.b16 %v399
    %v439 = vunpack.c.l.b16 %v400
    %v440 = vunpack.c.l.b16 %v401
    %v441 = vpack.c.b16 %v426, %v425
    %v442 = vpack.c.b16 %v428, %v427
    %v443 = vpack.c.b16 %v430, %v429
    %v444 = vpack.c.b16 %v432, %v431
    %v445 = vpack.c.b16 %v434, %v433
    %v446 = vpack.c.b16 %v436, %v435
    %v447 = vpack.c.b16 %v438, %v437
    %v448 = vpack.c.b16 %v440, %v439
    %457 = vmatprep.subr.bf16.mxu0 0
    %458 = vmatpush1.bf16.msra.mxu0 %v441
    %459 = vmatprep.subr.bf16.mxu0 0
    %460 = vmatpush1.bf16.msra.mxu0 %v442
    %461 = vmatprep.subr.bf16.mxu0 0
    %462 = vmatpush1.bf16.msra.mxu0 %v443
    %463 = vmatprep.subr.bf16.mxu0 0
    %464 = vmatpush1.bf16.msra.mxu0 %v444
    %465 = vmatprep.subr.bf16.mxu0 0
    %466 = vmatpush1.bf16.msra.mxu0 %v445
    %467 = vmatprep.subr.bf16.mxu0 0
    %468 = vmatpush1.bf16.msra.mxu0 %v446
    %469 = vmatprep.subr.bf16.mxu0 0
    %470 = vmatpush1.bf16.msra.mxu0 %v447
    %471 = vmatprep.subr.bf16.mxu0 0
    %472 = vmatpush1.bf16.msra.mxu0 %v448
    %473 = vmatprep.subr.bf16.mxu0 0
    %474 = vmatpush1.bf16.msra.mxu0 0
    %475 = vmatprep.subr.bf16.mxu0 0
    %476 = vmatpush1.bf16.msra.mxu0 0
    %477 = vmatprep.subr.bf16.mxu0 0
    %478 = vmatpush1.bf16.msra.mxu0 0
    %479 = vmatprep.subr.bf16.mxu0 0
    %480 = vmatpush1.bf16.msra.mxu0 0
    %481 = vmatprep.subr.bf16.mxu0 0
    %482 = vmatpush1.bf16.msra.mxu0 0
    %483 = vmatprep.subr.bf16.mxu0 0
    %484 = vmatpush1.bf16.msra.mxu0 0
    %485 = vmatprep.subr.bf16.mxu0 0
    %486 = vmatpush1.bf16.msra.mxu0 0
    %487 = vmatprep.subr.bf16.mxu0 0
    %488 = vmatpush1.bf16.msra.mxu0 0
    %489 = vmatprep.mubr.bf16.mxu0 0
    %490 = vmatmul.mubr.bf16.gmra.mrb[0].mxu0 %v385
    %v491 = vpop.f32.mrb[0].mxu0
    %v492 = vadd.f32 %v407, %v491
    %v493 = vpop.f32.mrb[0].mxu0
    %v494 = vpop.f32.mrb[0].mxu0
    %v495 = vadd.f32 %v407, %v494
    %v496 = vpop.f32.mrb[0].mxu0
    %497 = vdwg.mxu0
    %v498 = vmul.f32 %v492, 0.5
    %v499 = vmul.f32 %v495, 0.5
    %v500 = vtanh.pop %v498
    %v501 = vtanh.pop %v499
    %v502 = vmul.f32 %v500, 0.5
    %v503 = vmul.f32 %v501, 0.5
    %v504 = vadd.f32 %v502, 0.5
    %v505 = vadd.f32 %v503, 0.5
    %506 = vst [vmem:[#allocation8] sm:$0xff] %v504
    %507 = vst [vmem:[#allocation8 + $0x8] sm:$0xff] %v505
    // Predicated region
    $region50: #{tpu_custom_call.1} parent=1 // pred_check
      _
    $region51: #{tpu_custom_call.1} parent=1 // pred_check_branch
      %509 = sbr.rel (0) target = $region53
    $region52: #{tpu_custom_call.1} parent=1 // pred_region
      %s511 = ssub.s32 256, 256
      %512 = vsyncadd [#allocation4], %s511
      %s513 = sshll.u32 [#allocation8], 4
      %s514 = int_to_ptr.vmem [resolvable:$true] %s513
      %519 = dma.vmem_to_hbm [thread:$0]  %s514, 256, %s9, [#allocation4], 128, 128, 8
    $region53: #{tpu_custom_call.1} parent=1 // pred_fallthru
      _
    // Predicated region
    $region54: #{tpu_custom_call.1} parent=1 // pred_check
      _
    $region55: #{tpu_custom_call.1} parent=1 // pred_check_branch
      %521 = sbr.rel (0) target = $region57
    $region56: #{tpu_custom_call.1} parent=1 // pred_region
      %522 = dma.done [#allocation4], 256
    $region57: #{tpu_custom_call.1} parent=1 // pred_fallthru
      _
    %523 = vsyncpa [#allocation3], 1
    %524 = vsyncpa [#allocation6], 1
    %525 = vsyncpa [#allocation4], 1

// kernel: tpu_custom_call.1
$region0: #{tpu_custom_call.1}
  #allocation0 [shape = 'u32[]', space=smem, size = 0x4, offset = 0x4, fixed_abs, tag = 'smem constant byte address 0x4 - core index']
  #allocation1 [shape = 'u32[144,128]{1,0:T(1,128)}', space=vmem, size = 0x12000, scoped, tag = 'internal scratch']
  %s0 = inlined_call_operand.vmem [shape: f32[16,4], index: 0, kind: input, shape index: {}]
  %s1 = inlined_call_operand.vmem [shape: bf16[4,128], index: 1, kind: input, shape index: {}]
  %s2 = inlined_call_operand.vmem [shape: f32[1,128], index: 2, kind: input, shape index: {}]
  %s3 = inlined_call_operand.hbm [shape: bf16[128,128], index: 3, kind: input, shape index: {}]
  %s4 = inlined_call_operand.vmem [shape: f32[1,128], index: 4, kind: input, shape index: {}]
  %s5 = inlined_call_operand.hbm [shape: bf16[128,128], index: 5, kind: input, shape index: {}]
  %s6 = inlined_call_operand.vmem [shape: f32[1,128], index: 6, kind: input, shape index: {}]
  %s7 = inlined_call_operand.hbm [shape: bf16[128,128], index: 7, kind: input, shape index: {}]
  %s8 = inlined_call_operand.vmem [shape: f32[1,128], index: 8, kind: input, shape index: {}]
  %s9 = inlined_call_operand.hbm [shape: f32[16,128], index: 9, kind: output, shape index: {}]
  %s10 = sld [smem:[#allocation0]]
  $region58: #{tpu_custom_call.1} parent=0
    _
  %s12 = ssub.s32 1, %s10
  %s13 = scalar_select 0, %s12, %s10
  $region1: #{tpu_custom_call.1} parent=0
    #allocation2 [shape = 'u8[32768]{0}', space=vmem, size = 0x8000, scoped, tag = 'input window, operand 3, single buffered']
    #allocation3 [shape = 's32[1]{0}', space=sflag, size = 0x4, scoped, tag = 'scoped memory for tpu_custom_call.1']
    #allocation4 [shape = 's32[1]{0}', space=sflag, size = 0x4, scoped, tag = 'scoped memory for tpu_custom_call.1']
    #allocation5 [shape = 'u8[32768]{0}', space=vmem, size = 0x8000, scoped, tag = 'input window, operand 5, single buffered']
    #allocation6 [shape = 's32[1]{0}', space=sflag, size = 0x4, scoped, tag = 'scoped memory for tpu_custom_call.1']
    #allocation7 [shape = 'u8[32768]{0}', space=vmem, size = 0x8000, scoped, tag = 'input window, operand 7, single buffered']
    #allocation8 [shape = 'u8[8192]{0}', space=vmem, size = 0x2000, scoped, tag = 'output window, operand 0, single buffered']
    %14 = vsyncpa [#allocation3], 0
    %15 = vsyncpa [#allocation6], 0
    %16 = vsyncpa [#allocation4], 0
    // Predicated region
    $region2: #{tpu_custom_call.1} parent=1 // pred_check
      _
    $region3: #{tpu_custom_call.1} parent=1 // pred_check_branch
      %18 = sbr.rel (0) target = $region5
    $region4: #{tpu_custom_call.1} parent=1 // pred_region
      _
    $region5: #{tpu_custom_call.1} parent=1 // pred_fallthru
      _
    // Predicated region
    $region6: #{tpu_custom_call.1} parent=1 // pred_check
      _
    $region7: #{tpu_custom_call.1} parent=1 // pred_check_branch
      %20 = sbr.rel (0) target = $region9
    $region8: #{tpu_custom_call.1} parent=1 // pred_region
      _
    $region9: #{tpu_custom_call.1} parent=1 // pred_fallthru
      _
    // Predicated region
    $region10: #{tpu_custom_call.1} parent=1 // pred_check
      _
    $region11: #{tpu_custom_call.1} parent=1 // pred_check_branch
      %22 = sbr.rel (0) target = $region13
    $region12: #{tpu_custom_call.1} parent=1 // pred_region
      _
    $region13: #{tpu_custom_call.1} parent=1 // pred_fallthru
      _
    // Predicated region
    $region14: #{tpu_custom_call.1} parent=1 // pred_check
      _
    $region15: #{tpu_custom_call.1} parent=1 // pred_check_branch
      %24 = sbr.rel (0) target = $region17
    $region16: #{tpu_custom_call.1} parent=1 // pred_region
      %s26 = ssub.s32 1024, 1024
      %27 = vsyncadd [#allocation3], %s26
      %s28 = sshll.u32 [#allocation2], 4
      %s29 = int_to_ptr.vmem [resolvable:$true] %s28
      %34 = dma.hbm_to_vmem [thread:$0]  %s3, 1024, %s29, [#allocation3], 64, 64, 4
    $region17: #{tpu_custom_call.1} parent=1 // pred_fallthru
      _
    // Predicated region
    $region18: #{tpu_custom_call.1} parent=1 // pred_check
      _
    $region19: #{tpu_custom_call.1} parent=1 // pred_check_branch
      %36 = sbr.rel (0) target = $region21
    $region20: #{tpu_custom_call.1} parent=1 // pred_region
      _
    $region21: #{tpu_custom_call.1} parent=1 // pred_fallthru
      _
    // Predicated region
    $region22: #{tpu_custom_call.1} parent=1 // pred_check
      _
    $region23: #{tpu_custom_call.1} parent=1 // pred_check_branch
      %38 = sbr.rel (0) target = $region25
    $region24: #{tpu_custom_call.1} parent=1 // pred_region
      %s40 = ssub.s32 1024, 1024
      %41 = vsyncadd [#allocation6], %s40
      %s42 = sshll.u32 [#allocation5], 4
      %s43 = int_to_ptr.vmem [resolvable:$true] %s42
      %48 = dma.hbm_to_vmem [thread:$0]  %s5, 1024, %s43, [#allocation6], 64, 64, 4
    $region25: #{tpu_custom_call.1} parent=1 // pred_fallthru
      _
    // Predicated region
    $region26: #{tpu_custom_call.1} parent=1 // pred_check
      _
    $region27: #{tpu_custom_call.1} parent=1 // pred_check_branch
      %50 = sbr.rel (0) target = $region29
    $region28: #{tpu_custom_call.1} parent=1 // pred_region
      _
    $region29: #{tpu_custom_call.1} parent=1 // pred_fallthru
      _
    // Predicated region
    $region30: #{tpu_custom_call.1} parent=1 // pred_check
      _
    $region31: #{tpu_custom_call.1} parent=1 // pred_check_branch
      %52 = sbr.rel (0) target = $region33
    $region32: #{tpu_custom_call.1} parent=1 // pred_region
      %s54 = ssub.s32 1024, 1024
      %55 = vsyncadd [#allocation6], %s54
      %s56 = sshll.u32 [#allocation7], 4
      %s57 = int_to_ptr.vmem [resolvable:$true] %s56
      %62 = dma.hbm_to_vmem [thread:$0]  %s7, 1024, %s57, [#allocation6], 64, 64, 4
    $region33: #{tpu_custom_call.1} parent=1 // pred_fallthru
      _
    // Predicated region
    $region34: #{tpu_custom_call.1} parent=1 // pred_check
      _
    $region35: #{tpu_custom_call.1} parent=1 // pred_check_branch
      %64 = sbr.rel (0) target = $region37
    $region36: #{tpu_custom_call.1} parent=1 // pred_region
      _
    $region37: #{tpu_custom_call.1} parent=1 // pred_fallthru
      _
    // Predicated region
    $region38: #{tpu_custom_call.1} parent=1 // pred_check
      _
    $region39: #{tpu_custom_call.1} parent=1 // pred_check_branch
      %66 = sbr.rel (0) target = $region41
    $region40: #{tpu_custom_call.1} parent=1 // pred_region
      %67 = dma.done [#allocation3], 1024
    $region41: #{tpu_custom_call.1} parent=1 // pred_fallthru
      _
    // Predicated region
    $region42: #{tpu_custom_call.1} parent=1 // pred_check
      _
    $region43: #{tpu_custom_call.1} parent=1 // pred_check_branch
      %69 = sbr.rel (0) target = $region45
    $region44: #{tpu_custom_call.1} parent=1 // pred_region
      %70 = dma.done [#allocation6], 1024
    $region45: #{tpu_custom_call.1} parent=1 // pred_fallthru
      _
    // Predicated region
    $region46: #{tpu_custom_call.1} parent=1 // pred_check
      _
    $region47: #{tpu_custom_call.1} parent=1 // pred_check_branch
      %72 = sbr.rel (0) target = $region49
    $region48: #{tpu_custom_call.1} parent=1 // pred_region
      %73 = dma.done [#allocation6], 1024
    $region49: #{tpu_custom_call.1} parent=1 // pred_fallthru
      _
    %v75 = vld [vmem:[%s0] sm:$0xff]
    %v76 = vld [vmem:[%s0 + $0x8] sm:$0xff]
    %v77 = vpack.c.bf16 %v76, %v75
    %v78 = vld [vmem:[%s1] sm:$0x3]
    %v79 = vld [vmem:[%s2] sm:$0x1]
    %v81 = vlaneseq
    %v82 = vshrl.u32 %v81, 7
    %v83 = vsub.s32 0, %v82
    %v84 = vrot.slane %v79, %v83
    %vm86 = vcmask 31744
    %v88 = vsel %vm86, %v77, 0
    %vm90 = vcmask 1041408
    %v92 = vsel %vm90, %v78, 0
    %94 = vmatprep.subr.bf16.mxu0 0
    %95 = vmatpush1.bf16.msra.mxu0 %v92
    %96 = vmatprep.subr.bf16.mxu0 0
    %97 = vmatpush1.bf16.msra.mxu0 0
    %98 = vmatprep.subr.bf16.mxu0 0
    %99 = vmatpush1.bf16.msra.mxu0 0
    %100 = vmatprep.subr.bf16.mxu0 0
    %101 = vmatpush1.bf16.msra.mxu0 0
    %102 = vmatprep.subr.bf16.mxu0 0
    %103 = vmatpush1.bf16.msra.mxu0 0
    %104 = vmatprep.subr.bf16.mxu0 0
    %105 = vmatpush1.bf16.msra.mxu0 0
    %106 = vmatprep.subr.bf16.mxu0 0
    %107 = vmatpush1.bf16.msra.mxu0 0
    %108 = vmatprep.subr.bf16.mxu0 0
    %109 = vmatpush1.bf16.msra.mxu0 0
    %110 = vmatprep.subr.bf16.mxu0 0
    %111 = vmatpush1.bf16.msra.mxu0 0
    %112 = vmatprep.subr.bf16.mxu0 0
    %113 = vmatpush1.bf16.msra.mxu0 0
    %114 = vmatprep.subr.bf16.mxu0 0
    %115 = vmatpush1.bf16.msra.mxu0 0
    %116 = vmatprep.subr.bf16.mxu0 0
    %117 = vmatpush1.bf16.msra.mxu0 0
    %118 = vmatprep.subr.bf16.mxu0 0
    %119 = vmatpush1.bf16.msra.mxu0 0
    %120 = vmatprep.subr.bf16.mxu0 0
    %121 = vmatpush1.bf16.msra.mxu0 0
    %122 = vmatprep.subr.bf16.mxu0 0
    %123 = vmatpush1.bf16.msra.mxu0 0
    %124 = vmatprep.subr.bf16.mxu0 0
    %125 = vmatpush1.bf16.msra.mxu0 0
    %126 = vmatprep.mubr.bf16.mxu0 0
    %127 = vmatmul.mubr.bf16.gmra.mrb[0].mxu0 %v88
    %v128 = vpop.f32.mrb[0].mxu0
    %v129 = vadd.f32 %v84, %v128
    %v130 = vpop.f32.mrb[0].mxu0
    %v131 = vpop.f32.mrb[0].mxu0
    %v132 = vadd.f32 %v84, %v131
    %v133 = vpop.f32.mrb[0].mxu0
    %134 = vdwg.mxu0
    %v135 = vmul.f32 %v129, 0.5
    %v136 = vmul.f32 %v132, 0.5
    %v137 = vtanh.pop %v135
    %v138 = vtanh.pop %v136
    %v139 = vmul.f32 %v137, 0.5
    %v140 = vmul.f32 %v138, 0.5
    %v141 = vadd.f32 %v139, 0.5
    %v142 = vadd.f32 %v140, 0.5
    %v143 = vpack.c.bf16 %v142, %v141
    %v144 = vld [vmem:[#allocation2] sm:$0xf]
    %v145 = vld [vmem:[#allocation2 + $0x4] sm:$0xf]
    %v146 = vld [vmem:[#allocation2 + $0x8] sm:$0xf]
    %v147 = vld [vmem:[#allocation2 + $0xc] sm:$0xf]
    %v148 = vld [vmem:[#allocation2 + $0x10] sm:$0xf]
    %v149 = vld [vmem:[#allocation2 + $0x14] sm:$0xf]
    %v150 = vld [vmem:[#allocation2 + $0x18] sm:$0xf]
    %v151 = vld [vmem:[#allocation2 + $0x1c] sm:$0xf]
    %v152 = vld [vmem:[#allocation2 + $0x20] sm:$0xf]
    %v153 = vld [vmem:[#allocation2 + $0x24] sm:$0xf]
    %v154 = vld [vmem:[#allocation2 + $0x28] sm:$0xf]
    %v155 = vld [vmem:[#allocation2 + $0x2c] sm:$0xf]
    %v156 = vld [vmem:[#allocation2 + $0x30] sm:$0xf]
    %v157 = vld [vmem:[#allocation2 + $0x34] sm:$0xf]
    %v158 = vld [vmem:[#allocation2 + $0x38] sm:$0xf]
    %v159 = vld [vmem:[#allocation2 + $0x3c] sm:$0xf]
    %v160 = vld [vmem:[%s4] sm:$0x1]
    %v162 = vlaneseq
    %v163 = vshrl.u32 %v162, 7
    %v164 = vsub.s32 0, %v163
    %v165 = vrot.slane %v160, %v164
    %v183 = vunpack.c.l.b16 %v144
    %v184 = vunpack.c.l.b16 %v145
    %v185 = vunpack.c.l.b16 %v146
    %v186 = vunpack.c.l.b16 %v147
    %v187 = vunpack.c.l.b16 %v148
    %v188 = vunpack.c.l.b16 %v149
    %v189 = vunpack.c.l.b16 %v150
    %v190 = vunpack.c.l.b16 %v151
    %v191 = vunpack.c.l.b16 %v152
    %v192 = vunpack.c.l.b16 %v153
    %v193 = vunpack.c.l.b16 %v154
    %v194 = vunpack.c.l.b16 %v155
    %v195 = vunpack.c.l.b16 %v156
    %v196 = vunpack.c.l.b16 %v157
    %v197 = vunpack.c.l.b16 %v158
    %v198 = vunpack.c.l.b16 %v159
    %v199 = vpack.c.b16 %v184, %v183
    %v200 = vpack.c.b16 %v186, %v185
    %v201 = vpack.c.b16 %v188, %v187
    %v202 = vpack.c.b16 %v190, %v189
    %v203 = vpack.c.b16 %v192, %v191
    %v204 = vpack.c.b16 %v194, %v193
    %v205 = vpack.c.b16 %v196, %v195
    %v206 = vpack.c.b16 %v198, %v197
    %215 = vmatprep.subr.bf16.mxu0 0
    %216 = vmatpush1.bf16.msra.mxu0 %v199
    %217 = vmatprep.subr.bf16.mxu0 0
    %218 = vmatpush1.bf16.msra.mxu0 %v200
    %219 = vmatprep.subr.bf16.mxu0 0
    %220 = vmatpush1.bf16.msra.mxu0 %v201
    %221 = vmatprep.subr.bf16.mxu0 0
    %222 = vmatpush1.bf16.msra.mxu0 %v202
    %223 = vmatprep.subr.bf16.mxu0 0
    %224 = vmatpush1.bf16.msra.mxu0 %v203
    %225 = vmatprep.subr.bf16.mxu0 0
    %226 = vmatpush1.bf16.msra.mxu0 %v204
    %227 = vmatprep.subr.bf16.mxu0 0
    %228 = vmatpush1.bf16.msra.mxu0 %v205
    %229 = vmatprep.subr.bf16.mxu0 0
    %230 = vmatpush1.bf16.msra.mxu0 %v206
    %231 = vmatprep.subr.bf16.mxu0 0
    %232 = vmatpush1.bf16.msra.mxu0 0
    %233 = vmatprep.subr.bf16.mxu0 0
    %234 = vmatpush1.bf16.msra.mxu0 0
    %235 = vmatprep.subr.bf16.mxu0 0
    %236 = vmatpush1.bf16.msra.mxu0 0
    %237 = vmatprep.subr.bf16.mxu0 0
    %238 = vmatpush1.bf16.msra.mxu0 0
    %239 = vmatprep.subr.bf16.mxu0 0
    %240 = vmatpush1.bf16.msra.mxu0 0
    %241 = vmatprep.subr.bf16.mxu0 0
    %242 = vmatpush1.bf16.msra.mxu0 0
    %243 = vmatprep.subr.bf16.mxu0 0
    %244 = vmatpush1.bf16.msra.mxu0 0
    %245 = vmatprep.subr.bf16.mxu0 0
    %246 = vmatpush1.bf16.msra.mxu0 0
    %247 = vmatprep.mubr.bf16.mxu0 0
    %248 = vmatmul.mubr.bf16.gmra.mrb[0].mxu0 %v143
    %v249 = vpop.f32.mrb[0].mxu0
    %v250 = vadd.f32 %v165, %v249
    %v251 = vpop.f32.mrb[0].mxu0
    %v252 = vpop.f32.mrb[0].mxu0
    %v253 = vadd.f32 %v165, %v252
    %v254 = vpop.f32.mrb[0].mxu0
    %255 = vdwg.mxu0
    %v256 = vmul.f32 %v250, 0.5
    %v257 = vmul.f32 %v253, 0.5
    %v258 = vtanh.pop %v256
    %v259 = vtanh.pop %v257
    %v260 = vmul.f32 %v258, 0.5
    %v261 = vmul.f32 %v259, 0.5
    %v262 = vadd.f32 %v260, 0.5
    %v263 = vadd.f32 %v261, 0.5
    %v264 = vpack.c.bf16 %v263, %v262
    %v265 = vld [vmem:[#allocation5] sm:$0xf]
    %v266 = vld [vmem:[#allocation5 + $0x4] sm:$0xf]
    %v267 = vld [vmem:[#allocation5 + $0x8] sm:$0xf]
    %v268 = vld [vmem:[#allocation5 + $0xc] sm:$0xf]
    %v269 = vld [vmem:[#allocation5 + $0x10] sm:$0xf]
    %v270 = vld [vmem:[#allocation5 + $0x14] sm:$0xf]
    %v271 = vld [vmem:[#allocation5 + $0x18] sm:$0xf]
    %v272 = vld [vmem:[#allocation5 + $0x1c] sm:$0xf]
    %v273 = vld [vmem:[#allocation5 + $0x20] sm:$0xf]
    %v274 = vld [vmem:[#allocation5 + $0x24] sm:$0xf]
    %v275 = vld [vmem:[#allocation5 + $0x28] sm:$0xf]
    %v276 = vld [vmem:[#allocation5 + $0x2c] sm:$0xf]
    %v277 = vld [vmem:[#allocation5 + $0x30] sm:$0xf]
    %v278 = vld [vmem:[#allocation5 + $0x34] sm:$0xf]
    %v279 = vld [vmem:[#allocation5 + $0x38] sm:$0xf]
    %v280 = vld [vmem:[#allocation5 + $0x3c] sm:$0xf]
    %v281 = vld [vmem:[%s6] sm:$0x1]
    %v283 = vlaneseq
    %v284 = vshrl.u32 %v283, 7
    %v285 = vsub.s32 0, %v284
    %v286 = vrot.slane %v281, %v285
    %v304 = vunpack.c.l.b16 %v265
    %v305 = vunpack.c.l.b16 %v266
    %v306 = vunpack.c.l.b16 %v267
    %v307 = vunpack.c.l.b16 %v268
    %v308 = vunpack.c.l.b16 %v269
    %v309 = vunpack.c.l.b16 %v270
    %v310 = vunpack.c.l.b16 %v271
    %v311 = vunpack.c.l.b16 %v272
    %v312 = vunpack.c.l.b16 %v273
    %v313 = vunpack.c.l.b16 %v274
    %v314 = vunpack.c.l.b16 %v275
    %v315 = vunpack.c.l.b16 %v276
    %v316 = vunpack.c.l.b16 %v277
    %v317 = vunpack.c.l.b16 %v278
    %v318 = vunpack.c.l.b16 %v279
    %v319 = vunpack.c.l.b16 %v280
    %v320 = vpack.c.b16 %v305, %v304
    %v321 = vpack.c.b16 %v307, %v306
    %v322 = vpack.c.b16 %v309, %v308
    %v323 = vpack.c.b16 %v311, %v310
    %v324 = vpack.c.b16 %v313, %v312
    %v325 = vpack.c.b16 %v315, %v314
    %v326 = vpack.c.b16 %v317, %v316
    %v327 = vpack.c.b16 %v319, %v318
    %336 = vmatprep.subr.bf16.mxu0 0
    %337 = vmatpush1.bf16.msra.mxu0 %v320
    %338 = vmatprep.subr.bf16.mxu0 0
    %339 = vmatpush1.bf16.msra.mxu0 %v321
    %340 = vmatprep.subr.bf16.mxu0 0
    %341 = vmatpush1.bf16.msra.mxu0 %v322
    %342 = vmatprep.subr.bf16.mxu0 0
    %343 = vmatpush1.bf16.msra.mxu0 %v323
    %344 = vmatprep.subr.bf16.mxu0 0
    %345 = vmatpush1.bf16.msra.mxu0 %v324
    %346 = vmatprep.subr.bf16.mxu0 0
    %347 = vmatpush1.bf16.msra.mxu0 %v325
    %348 = vmatprep.subr.bf16.mxu0 0
    %349 = vmatpush1.bf16.msra.mxu0 %v326
    %350 = vmatprep.subr.bf16.mxu0 0
    %351 = vmatpush1.bf16.msra.mxu0 %v327
    %352 = vmatprep.subr.bf16.mxu0 0
    %353 = vmatpush1.bf16.msra.mxu0 0
    %354 = vmatprep.subr.bf16.mxu0 0
    %355 = vmatpush1.bf16.msra.mxu0 0
    %356 = vmatprep.subr.bf16.mxu0 0
    %357 = vmatpush1.bf16.msra.mxu0 0
    %358 = vmatprep.subr.bf16.mxu0 0
    %359 = vmatpush1.bf16.msra.mxu0 0
    %360 = vmatprep.subr.bf16.mxu0 0
    %361 = vmatpush1.bf16.msra.mxu0 0
    %362 = vmatprep.subr.bf16.mxu0 0
    %363 = vmatpush1.bf16.msra.mxu0 0
    %364 = vmatprep.subr.bf16.mxu0 0
    %365 = vmatpush1.bf16.msra.mxu0 0
    %366 = vmatprep.subr.bf16.mxu0 0
    %367 = vmatpush1.bf16.msra.mxu0 0
    %368 = vmatprep.mubr.bf16.mxu0 0
    %369 = vmatmul.mubr.bf16.gmra.mrb[0].mxu0 %v264
    %v370 = vpop.f32.mrb[0].mxu0
    %v371 = vadd.f32 %v286, %v370
    %v372 = vpop.f32.mrb[0].mxu0
    %v373 = vpop.f32.mrb[0].mxu0
    %v374 = vadd.f32 %v286, %v373
    %v375 = vpop.f32.mrb[0].mxu0
    %376 = vdwg.mxu0
    %v377 = vmul.f32 %v371, 0.5
    %v378 = vmul.f32 %v374, 0.5
    %v379 = vtanh.pop %v377
    %v380 = vtanh.pop %v378
    %v381 = vmul.f32 %v379, 0.5
    %v382 = vmul.f32 %v380, 0.5
    %v383 = vadd.f32 %v381, 0.5
    %v384 = vadd.f32 %v382, 0.5
    %v385 = vpack.c.bf16 %v384, %v383
    %v386 = vld [vmem:[#allocation7] sm:$0xf]
    %v387 = vld [vmem:[#allocation7 + $0x4] sm:$0xf]
    %v388 = vld [vmem:[#allocation7 + $0x8] sm:$0xf]
    %v389 = vld [vmem:[#allocation7 + $0xc] sm:$0xf]
    %v390 = vld [vmem:[#allocation7 + $0x10] sm:$0xf]
    %v391 = vld [vmem:[#allocation7 + $0x14] sm:$0xf]
    %v392 = vld [vmem:[#allocation7 + $0x18] sm:$0xf]
    %v393 = vld [vmem:[#allocation7 + $0x1c] sm:$0xf]
    %v394 = vld [vmem:[#allocation7 + $0x20] sm:$0xf]
    %v395 = vld [vmem:[#allocation7 + $0x24] sm:$0xf]
    %v396 = vld [vmem:[#allocation7 + $0x28] sm:$0xf]
    %v397 = vld [vmem:[#allocation7 + $0x2c] sm:$0xf]
    %v398 = vld [vmem:[#allocation7 + $0x30] sm:$0xf]
    %v399 = vld [vmem:[#allocation7 + $0x34] sm:$0xf]
    %v400 = vld [vmem:[#allocation7 + $0x38] sm:$0xf]
    %v401 = vld [vmem:[#allocation7 + $0x3c] sm:$0xf]
    %v402 = vld [vmem:[%s8] sm:$0x1]
    %v404 = vlaneseq
    %v405 = vshrl.u32 %v404, 7
    %v406 = vsub.s32 0, %v405
    %v407 = vrot.slane %v402, %v406
    %v425 = vunpack.c.l.b16 %v386
    %v426 = vunpack.c.l.b16 %v387
    %v427 = vunpack.c.l.b16 %v388
    %v428 = vunpack.c.l.b16 %v389
    %v429 = vunpack.c.l.b16 %v390
    %v430 = vunpack.c.l.b16 %v391
    %v431 = vunpack.c.l.b16 %v392
    %v432 = vunpack.c.l.b16 %v393
    %v433 = vunpack.c.l.b16 %v394
    %v434 = vunpack.c.l.b16 %v395
    %v435 = vunpack.c.l.b16 %v396
    %v436 = vunpack.c.l.b16 %v397
    %v437 = vunpack.c.l.b16 %v398
    %v438 = vunpack.c.l.b16 %v399
    %v439 = vunpack.c.l.b16 %v400
    %v440 = vunpack.c.l.b16 %v401
    %v441 = vpack.c.b16 %v426, %v425
    %v442 = vpack.c.b16 %v428, %v427
    %v443 = vpack.c.b16 %v430, %v429
    %v444 = vpack.c.b16 %v432, %v431
    %v445 = vpack.c.b16 %v434, %v433
    %v446 = vpack.c.b16 %v436, %v435
    %v447 = vpack.c.b16 %v438, %v437
    %v448 = vpack.c.b16 %v440, %v439
    %457 = vmatprep.subr.bf16.mxu0 0
    %458 = vmatpush1.bf16.msra.mxu0 %v441
    %459 = vmatprep.subr.bf16.mxu0 0
    %460 = vmatpush1.bf16.msra.mxu0 %v442
    %461 = vmatprep.subr.bf16.mxu0 0
    %462 = vmatpush1.bf16.msra.mxu0 %v443
    %463 = vmatprep.subr.bf16.mxu0 0
    %464 = vmatpush1.bf16.msra.mxu0 %v444
    %465 = vmatprep.subr.bf16.mxu0 0
    %466 = vmatpush1.bf16.msra.mxu0 %v445
    %467 = vmatprep.subr.bf16.mxu0 0
    %468 = vmatpush1.bf16.msra.mxu0 %v446
    %469 = vmatprep.subr.bf16.mxu0 0
    %470 = vmatpush1.bf16.msra.mxu0 %v447
    %471 = vmatprep.subr.bf16.mxu0 0
    %472 = vmatpush1.bf16.msra.mxu0 %v448
    %473 = vmatprep.subr.bf16.mxu0 0
    %474 = vmatpush1.bf16.msra.mxu0 0
    %475 = vmatprep.subr.bf16.mxu0 0
    %476 = vmatpush1.bf16.msra.mxu0 0
    %477 = vmatprep.subr.bf16.mxu0 0
    %478 = vmatpush1.bf16.msra.mxu0 0
    %479 = vmatprep.subr.bf16.mxu0 0
    %480 = vmatpush1.bf16.msra.mxu0 0
    %481 = vmatprep.subr.bf16.mxu0 0
    %482 = vmatpush1.bf16.msra.mxu0 0
    %483 = vmatprep.subr.bf16.mxu0 0
    %484 = vmatpush1.bf16.msra.mxu0 0
    %485 = vmatprep.subr.bf16.mxu0 0
    %486 = vmatpush1.bf16.msra.mxu0 0
    %487 = vmatprep.subr.bf16.mxu0 0
    %488 = vmatpush1.bf16.msra.mxu0 0
    %489 = vmatprep.mubr.bf16.mxu0 0
    %490 = vmatmul.mubr.bf16.gmra.mrb[0].mxu0 %v385
    %v491 = vpop.f32.mrb[0].mxu0
    %v492 = vadd.f32 %v407, %v491
    %v493 = vpop.f32.mrb[0].mxu0
    %v494 = vpop.f32.mrb[0].mxu0
    %v495 = vadd.f32 %v407, %v494
    %v496 = vpop.f32.mrb[0].mxu0
    %497 = vdwg.mxu0
    %v498 = vmul.f32 %v492, 0.5
    %v499 = vmul.f32 %v495, 0.5
    %v500 = vtanh.pop %v498
    %v501 = vtanh.pop %v499
    %v502 = vmul.f32 %v500, 0.5
    %v503 = vmul.f32 %v501, 0.5
    %v504 = vadd.f32 %v502, 0.5
    %v505 = vadd.f32 %v503, 0.5
    %506 = vst [vmem:[#allocation8] sm:$0xff] %v504
    %507 = vst [vmem:[#allocation8 + $0x8] sm:$0xff] %v505
    // Predicated region
    $region50: #{tpu_custom_call.1} parent=1 // pred_check
      _
    $region51: #{tpu_custom_call.1} parent=1 // pred_check_branch
      %509 = sbr.rel (0) target = $region53
    $region52: #{tpu_custom_call.1} parent=1 // pred_region
      %s511 = ssub.s32 256, 256
      %512 = vsyncadd [#allocation4], %s511
      %s513 = sshll.u32 [#allocation8], 4
      %s514 = int_to_ptr.vmem [resolvable:$true] %s513
      %519 = dma.vmem_to_hbm [thread:$0]  %s514, 256, %s9, [#allocation4], 128, 128, 8
    $region53: #{tpu_custom_call.1} parent=1 // pred_fallthru
      _
    // Predicated region
    $region54: #{tpu_custom_call.1} parent=1 // pred_check
      _
    $region55: #{tpu_custom_call.1} parent=1 // pred_check_branch
      %521 = sbr.rel (0) target = $region57
    $region56: #{tpu_custom_call.1} parent=1 // pred_region
      %522 = dma.done [#allocation4], 256
    $region57: #{tpu_custom_call.1} parent=1 // pred_fallthru
      _
    %523 = vsyncpa [#allocation3], 1
    %524 = vsyncpa [#allocation6], 1
    %525 = vsyncpa [#allocation4], 1

</llo_original>
